<compile_context>
chip_gen: v7x
topology: tpu7x:2x2x1
jax: 0.10.0
libtpu: 0.0.40
codegen_flags: <defaults>
</compile_context>

<pallas_src>
import numpy as np

import jax
import jax.numpy as jnp
from jax.experimental import pallas as pl
from jax.experimental.pallas import tpu as pltpu

# ---------------- small shapes consistent with the module's usage -------------
B          = 2     # batch
L          = 8     # sequence length (x.size(1)); n_position > L as in the module
C          = 64    # x feature dim (x.size(2)); may be <= d_hid
D_HID      = 96    # d_hid of the table (> C so the :x.size(2) slice is non-trivial)
N_POSITION = 16    # table length (> L so the :x.size(1) slice is non-trivial)


# ---------------- sinusoid table (identical math to the torch module) ---------
def sinusoid_table(n_position, d_hid):
    pos = np.arange(n_position)[:, None].astype(np.float64)
    j = np.arange(d_hid)[None, :]
    angle = pos / np.power(10000.0, 2.0 * (j // 2) / d_hid)
    tab = np.zeros((n_position, d_hid), dtype=np.float64)
    tab[:, 0::2] = np.sin(angle[:, 0::2])
    tab[:, 1::2] = np.cos(angle[:, 1::2])
    return jnp.asarray(tab, dtype=jnp.float32)        # [n_position, d_hid]


# ---------------- the Pallas kernel --------------------------------------------
def _posenc_kernel(x_ref, pos_ref, out_ref):
    # x_ref:   [block_l, C]    (batch dim squeezed by the BlockSpec)
    # pos_ref: [block_l, C]    (same block for every batch step -> VMEM-resident)
    # out_ref: [block_l, 2C]
    c = x_ref.shape[-1]
    if c % 128 == 0:
        # Both halves are lane-tile aligned: two unmasked full-width stores,
        # no lane-axis concat (XLU roll + select) and no joined 2C live value.
        out_ref[:, :c] = x_ref[...]
        out_ref[:, c:] = pos_ref[...]
    else:
        # C < 128 (toy case): a split store would be two masked partial vst;
        # a single lane-dense 2C-wide store is strictly better.
        out_ref[...] = jnp.concatenate([x_ref[...], pos_ref[...]], axis=-1)


def _pick_block_l(l):
    # Largest row-tile that divides L (amortizes per-grid-step overhead while
    # keeping blocks (8,128)-friendly). Toy L=8 -> 8.
    for cand in (512, 256, 128, 64, 32, 16, 8):
        if l % cand == 0:
            return cand
    return l


# ---------------- wrapper -------------------------------------------------------
def positional_encoding_forward(x, pos_table):
    """x: [B, L, C]; pos_table: [n_position, d_hid]; returns [B, L, 2*C]."""
    b, l, c = x.shape
    # pos_table[:, :x.size(1), :x.size(2)] — static slice, cast once to x.dtype
    # so there is no in-kernel promotion / store-side re-cast.
    pos = pos_table[:l, :c].astype(x.dtype)

    block_l = _pick_block_l(l)
    grid = (l // block_l, b)   # batch innermost: pos block index constant over it

    return pl.pallas_call(
        _posenc_kernel,
        out_shape=jax.ShapeDtypeStruct((b, l, 2 * c), x.dtype),
        grid=grid,
        in_specs=[
            # x: squeeze the batch dim -> kernel sees a dense (block_l, C) slab.
            pl.BlockSpec((None, block_l, c), lambda li, bi: (bi, li, 0)),
            # pos: index_map ignores the batch axis -> same block across the
            # inner batch loop, so it is DMA'd once per seq tile, not per batch.
            pl.BlockSpec((block_l, c), lambda li, bi: (li, 0)),
        ],
        out_specs=pl.BlockSpec((None, block_l, 2 * c), lambda li, bi: (bi, li, 0)),
        compiler_params=pltpu.CompilerParams(
            # Pure independent copies: both axes parallel (lets v7x shard the
            # grid across its 2 TensorCores; harmless on v5e/v6e).
            dimension_semantics=("parallel", "parallel"),
        ),
    )(x, pos)


# ---------------- pure-JAX reference (for correctness check) -------------------
def _reference(x, pos_table):
    b, l, c = x.shape
    pos = jnp.broadcast_to(pos_table[:l, :c].astype(x.dtype)[None, :, :], (b, l, c))
    return jnp.concatenate([x, pos], axis=-1)


if __name__ == "__main__":
    key = jax.random.PRNGKey(0)
    x = jax.random.normal(key, (B, L, C), jnp.float32)
    pos_table = sinusoid_table(N_POSITION, D_HID)

    out = jax.jit(positional_encoding_forward)(x, pos_table)
    jax.block_until_ready(out)

    ref = _reference(x, pos_table)

    assert out.shape == (B, L, 2 * C), out.shape
    assert bool(jnp.all(jnp.isfinite(out)))
    assert bool(jnp.allclose(out, ref, atol=1e-6, rtol=1e-6)), "mismatch vs reference"
    # first half is x unchanged, second half is the batch-broadcast table slice
    assert bool(jnp.allclose(out[:, :, :C], x))
    assert bool(jnp.allclose(out[0, :, C:], pos_table[:L, :C]))
    assert bool(jnp.allclose(out[1, :, C:], pos_table[:L, :C]))

    print("KERNEL_OK")
</pallas_src>

<mosaic_0001>
module attributes {stable_mosaic.version = 11 : i64} {
  func.func @_posenc_kernel(%arg0: i32, %arg1: i32, %arg2: memref<1x8x64xf32, #tpu.memory_space<vmem>>, %arg3: memref<8x64xf32, #tpu.memory_space<vmem>>, %arg4: memref<1x8x128xf32, #tpu.memory_space<vmem>>) attributes {dimension_semantics = [#tpu.dimension_semantics<parallel>, #tpu.dimension_semantics<parallel>], iteration_bounds = array<i64: 1, 2>, scalar_prefetch = 0 : i64, scratch_operands = 0 : i64, tpu.core_type = #tpu.core_type<tc>, window_params = [{transform_indices = @transform_0, window_bounds = array<i64: 1, 8, 64>}, {transform_indices = @transform_1, window_bounds = array<i64: 8, 64>}, {transform_indices = @transform_2, window_bounds = array<i64: 1, 8, 128>}]} {
    %c0 = arith.constant 0 : index
    %c0_0 = arith.constant 0 : index
    %c0_1 = arith.constant 0 : index
    %0 = vector.load %arg2[%c0, %c0_0, %c0_1] : memref<1x8x64xf32, #tpu.memory_space<vmem>>, vector<1x8x64xf32>
    %1 = vector.shape_cast %0 : vector<1x8x64xf32> to vector<8x64xf32>
    %c0_2 = arith.constant 0 : index
    %c0_3 = arith.constant 0 : index
    %2 = vector.load %arg3[%c0_2, %c0_3] : memref<8x64xf32, #tpu.memory_space<vmem>>, vector<8x64xf32>
    %3 = tpu.concatenate %1, %2 in 1 : vector<8x64xf32>, vector<8x64xf32> -> vector<8x128xf32>
    %c0_4 = arith.constant 0 : index
    %c0_5 = arith.constant 0 : index
    %c0_6 = arith.constant 0 : index
    %4 = vector.load %arg4[%c0_4, %c0_5, %c0_6] : memref<1x8x128xf32, #tpu.memory_space<vmem>>, vector<1x8x128xf32>
    %5 = vector.shape_cast %4 : vector<1x8x128xf32> to vector<8x128xf32>
    %6 = vector.shape_cast %3 : vector<8x128xf32> to vector<1x8x128xf32>
    tpu.vector_store %arg4[%c0_4, %c0_5, %c0_6], %6 {strides = array<i32>} : memref<1x8x128xf32, #tpu.memory_space<vmem>>, vector<1x8x128xf32>,
    return
  }
  func.func @transform_0(%arg0: i32, %arg1: i32) -> (i32, i32, i32) {
    %c0_i32 = arith.constant 0 : i32
    %c0_i32_0 = arith.constant 0 : i32
    return %arg1, %arg0, %c0_i32 : i32, i32, i32
  }
  func.func @transform_1(%arg0: i32, %arg1: i32) -> (i32, i32) {
    %c0_i32 = arith.constant 0 : i32
    %c0_i32_0 = arith.constant 0 : i32
    return %arg0, %c0_i32 : i32, i32
  }
  func.func @transform_2(%arg0: i32, %arg1: i32) -> (i32, i32, i32) {
    %c0_i32 = arith.constant 0 : i32
    %c0_i32_0 = arith.constant 0 : i32
    return %arg1, %arg0, %c0_i32 : i32, i32, i32
  }
}

</mosaic_0001>

<llo_original>
// kernel: positional_encoding_forward.1
$region0: #{positional_encoding_forward.1}
  #allocation0 [shape = 'u32[]', space=smem, size = 0x4, offset = 0x4, fixed_abs, tag = 'smem constant byte address 0x4 - core index']
  #allocation1 [shape = 'u32[144,128]{1,0:T(1,128)}', space=vmem, size = 0x12000, scoped, tag = 'internal scratch']
  %s0 = inlined_call_operand.vmem [shape: f32[2,8,64], index: 0, kind: input, shape index: {}]
  %s1 = inlined_call_operand.vmem [shape: f32[8,64], index: 1, kind: input, shape index: {}]
  %s2 = inlined_call_operand.hbm [shape: f32[2,8,128], index: 2, kind: output, shape index: {}]
  %s3 = sld [smem:[#allocation0]]
  $region41: #{positional_encoding_forward.1} parent=0
    _
  %s5 = ssub.s32 1, %s3
  %s6 = scalar_select 0, %s5, %s3
  $region1: #{positional_encoding_forward.1} parent=0
    #allocation2 [shape = 'u8[8192]{0}', space=vmem, size = 0x2000, scoped, tag = 'output window, operand 0']
    #allocation3 [shape = 's32[2]{0}', space=sflag, size = 0x8, scoped, tag = 'scoped memory for positional_encoding_forward.1']
    %7 = vsyncpa [#allocation3], 0
    %s8 = scalar_lea.sflag [#allocation3], 1
    %9 = vsyncpa %s8, 0
    loop: start=0, step=1, limit=4
    $region2: #{positional_encoding_forward.1} parent=1 // loop_pre_header
      _
    $region3: #{positional_encoding_forward.1} parent=1 // loop_header
      %s11 = sphi 0, %s15
      %p12 = scmp.ge.s32.totalorder %s11, 4
      %s18 = sphi 0, %s30
      %s19 = sphi 0, %s26
      %s20 = sphi 0, %s18
      %s21 = sphi 0, %s19
      %s22 = sphi 0, %s20
      %s23 = sphi 0, %s21
      %s35 = sphi 0, %s37
      %s38 = sphi 0, %s35
      %s39 = sphi 0, %s38
      %s55 = sphi 0, %s39
      %s61 = sphi 0, %s63
      %s64 = sphi 0, %s61
      %s65 = sphi 0, %s64
      %s81 = sphi 0, %s65
      %s89 = sphi 0, %s91
      %s92 = sphi 0, %s89
      %s93 = sphi 0, %s92
      %s109 = sphi 0, %s93
    $region4: #{positional_encoding_forward.1} parent=1 // loop_header_branch
      %14 = sbr.rel (%p12) target = $region8
    $region5: #{positional_encoding_forward.1} parent=1 // loop_body
      %s16 = ssub.s32 %s11, 1
      %s17 = ssub.s32 %s11, 2
      %s24 = sadd.s32 1, %s19
      %p25 = scmp.ge.s32.totalorder %s24, 2
      %s26 = scalar_select %p25, 0, %s24
      %s27 = sadd.s32 1, %s18
      %s28 = scalar_select %p25, %s27, %s18
      %p29 = scmp.ge.s32.totalorder %s28, 1
      %s30 = scalar_select %p29, 0, %s28
      %s31 = ssub.s32 %s19, %s26
      %s32 = ssub.s32 %s18, %s30
      %s33 = sor.u32 %s31, %s32
      %p34 = scmp.eq.s32.totalorder %s33, 0
      %s36 = sadd.s32 %s35, 1
      %s37 = scalar_select %p34, %s35, %s36
      %p40 = pneg %p34
      %p41 = scmp.eq.s32.totalorder %s11, 1
      %p42 = por %p40, %p41
      %p43 = scmp.ne.s32.totalorder %s35, %s38
      %p44 = scmp.eq.s32.totalorder %s11, 0
      %p45 = por %p43, %p44
      %p46 = scmp.ne.s32.totalorder %s35, %s38
      %p47 = scmp.eq.s32.totalorder %s16, 1
      %p48 = por %p46, %p47
      %p49 = scmp.ne.s32.totalorder %s38, %s39
      %p50 = scmp.eq.s32.totalorder %s16, 0
      %p51 = por %p49, %p50
      %p52 = scmp.ne.s32.totalorder %s38, %s39
      %p53 = scmp.eq.s32.totalorder %s17, 1
      %p54 = por %p52, %p53
      %p56 = scmp.ne.s32.totalorder %s39, %s55
      %p57 = scmp.eq.s32.totalorder %s17, 0
      %p58 = por %p56, %p57
      %s59 = ssub.s32 %s18, %s30
      %p60 = scmp.eq.s32.totalorder %s59, 0
      %s62 = sadd.s32 %s61, 1
      %s63 = scalar_select %p60, %s61, %s62
      %p66 = pneg %p60
      %p67 = scmp.eq.s32.totalorder %s11, 1
      %p68 = por %p66, %p67
      %p69 = scmp.ne.s32.totalorder %s61, %s64
      %p70 = scmp.eq.s32.totalorder %s11, 0
      %p71 = por %p69, %p70
      %p72 = scmp.ne.s32.totalorder %s61, %s64
      %p73 = scmp.eq.s32.totalorder %s16, 1
      %p74 = por %p72, %p73
      %p75 = scmp.ne.s32.totalorder %s64, %s65
      %p76 = scmp.eq.s32.totalorder %s16, 0
      %p77 = por %p75, %p76
      %p78 = scmp.ne.s32.totalorder %s64, %s65
      %p79 = scmp.eq.s32.totalorder %s17, 1
      %p80 = por %p78, %p79
      %p82 = scmp.ne.s32.totalorder %s65, %s81
      %p83 = scmp.eq.s32.totalorder %s17, 0
      %p84 = por %p82, %p83
      %s85 = ssub.s32 %s19, %s26
      %s86 = ssub.s32 %s18, %s30
      %s87 = sor.u32 %s85, %s86
      %p88 = scmp.eq.s32.totalorder %s87, 0
      %s90 = sadd.s32 %s89, 1
      %s91 = scalar_select %p88, %s89, %s90
      %p94 = pneg %p88
      %p95 = scmp.eq.s32.totalorder %s11, 1
      %p96 = por %p94, %p95
      %p97 = scmp.ne.s32.totalorder %s89, %s92
      %p98 = scmp.eq.s32.totalorder %s11, 0
      %p99 = por %p97, %p98
      %p100 = scmp.ne.s32.totalorder %s89, %s92
      %p101 = scmp.eq.s32.totalorder %s16, 1
      %p102 = por %p100, %p101
      %p103 = scmp.ne.s32.totalorder %s92, %s93
      %p104 = scmp.eq.s32.totalorder %s16, 0
      %p105 = por %p103, %p104
      %p106 = scmp.ne.s32.totalorder %s92, %s93
      %p107 = scmp.eq.s32.totalorder %s17, 1
      %p108 = por %p106, %p107
      %p110 = scmp.ne.s32.totalorder %s93, %s109
      %p111 = scmp.eq.s32.totalorder %s17, 0
      %p112 = por %p110, %p111
      %p113 = scmp.le.s32.totalorder 1, %s11
      %p114 = scmp.lt.s32.totalorder %s11, 3
      %p115 = pnand %p113, %p114
      %p116 = pneg %p115
      // Predicated region
      $region9: #{positional_encoding_forward.1} parent=5 // pred_check
        _
      $region10: #{positional_encoding_forward.1} parent=5 // pred_check_branch
        %118 = sbr.rel (%p115) target = $region12
      $region11: #{positional_encoding_forward.1} parent=5 // pred_region
        %s119 = ssub.s32 %s11, 1
        // Predicated region
        $region13: #{positional_encoding_forward.1} parent=11 // pred_check
          %p120 = pneg %p77
        $region14: #{positional_encoding_forward.1} parent=11 // pred_check_branch
          %122 = sbr.rel (%p120) target = $region16
        $region15: #{positional_encoding_forward.1} parent=11 // pred_region
          %p123 = scmp.lt.s32.totalorder %s20, 0
          %s124 = scalar_select %p123, %s20, 0
          %s125 = smul.addr %s124, 8
          %s126 = scalar_lea.vmem %s1, %s125
        $region16: #{positional_encoding_forward.1} parent=11 // pred_fallthru
          _
      $region12: #{positional_encoding_forward.1} parent=5 // pred_fallthru
        _
      %p127 = scmp.lt.s32.totalorder %s11, 2
      // Predicated region
      $region17: #{positional_encoding_forward.1} parent=5 // pred_check
        %p128 = pneg %p127
      $region18: #{positional_encoding_forward.1} parent=5 // pred_check_branch
        %130 = sbr.rel (%p128) target = $region20
      $region19: #{positional_encoding_forward.1} parent=5 // pred_region
        // Predicated region
        $region21: #{positional_encoding_forward.1} parent=19 // pred_check
          %p131 = pneg %p45
        $region22: #{positional_encoding_forward.1} parent=19 // pred_check_branch
          %133 = sbr.rel (%p131) target = $region24
        $region23: #{positional_encoding_forward.1} parent=19 // pred_region
          %p134 = scmp.lt.s32.totalorder %s19, 1
          %s135 = scalar_select %p134, %s19, 1
          %p136 = scmp.lt.s32.totalorder %s18, 0
          %s137 = scalar_select %p136, %s18, 0
          %s138 = sadd.s32 %s137, %s135
          %s139 = smul.addr %s138, 8
          %s140 = scalar_lea.vmem %s0, %s139
        $region24: #{positional_encoding_forward.1} parent=19 // pred_fallthru
          _
      $region20: #{positional_encoding_forward.1} parent=5 // pred_fallthru
        _
      %p141 = scmp.le.s32.totalorder 1, %s11
      %p142 = scmp.lt.s32.totalorder %s11, 3
      %p143 = pnand %p141, %p142
      %p144 = pneg %p143
      // Predicated region
      $region25: #{positional_encoding_forward.1} parent=5 // pred_check
        _
      $region26: #{positional_encoding_forward.1} parent=5 // pred_check_branch
        %146 = sbr.rel (%p143) target = $region28
      $region27: #{positional_encoding_forward.1} parent=5 // pred_region
        %s147 = ssub.s32 %s11, 1
        %p148 = scmp.lt.s32.totalorder %s21, 1
        %s149 = scalar_select %p148, %s21, 1
        %p150 = scmp.lt.s32.totalorder %s20, 0
        %s151 = scalar_select %p150, %s20, 0
        %s152 = sadd.s32 %s151, %s149
        %s153 = smul.addr %s152, 8
        %s154 = scalar_lea.vmem %s0, %s153
        %p155 = pneg %p51
        %p156 = pneg %p48
        %p157 = scmp.lt.s32.totalorder %s20, 0
        %s158 = scalar_select %p157, %s20, 0
        %s159 = smul.addr %s158, 8
        %s160 = scalar_lea.vmem %s1, %s159
        %p161 = pneg %p77
        %p162 = pneg %p74
        %p163 = pneg %p105
        %p164 = pneg %p102
        %s165 = sand.u32 %s92, 1
        %s166 = scalar_lea.sflag [#allocation3], %s165
        %s167 = sand.u32 %s92, 1
        %s168 = smul.addr %s167, 8
        %s169 = scalar_lea.vmem [#allocation2], %s168
        %p170 = scmp.lt.s32.totalorder %s21, 1
        %s171 = scalar_select %p170, %s21, 1
        %p172 = scmp.lt.s32.totalorder %s20, 0
        %s173 = scalar_select %p172, %s20, 0
        %s174 = sadd.s32 %s173, %s171
        %s175 = smul.addr %s174, 8
        %s176 = scalar_lea.vmem %s0, %s175
        %p177 = scmp.lt.s32.totalorder %s20, 0
        %s178 = scalar_select %p177, %s20, 0
        %s179 = smul.addr %s178, 8
        %s180 = scalar_lea.vmem %s1, %s179
        %v181 = vld [vmem:[%s176] sm:$0xff]
        %v182 = vld [vmem:[%s180] sm:$0xff]
        %184 = vrot.lane.b32.xlu0 %v182, 64
        %v185 = vpop.permute.xlu0 %184
        %vm187 = vcmask 523264
        %v188 = vsel %vm187, %v181, %v185
        %189 = vst [vmem:[%s169] sm:$0xff] %v188
        %s190 = sand.u32 %s92, 1
        %s191 = scalar_lea.sflag [#allocation3], %s190
        %s192 = sand.u32 %s92, 1
        %s193 = smul.addr %s192, 8
        %s194 = scalar_lea.vmem [#allocation2], %s193
        // Predicated region
        $region29: #{positional_encoding_forward.1} parent=27 // pred_check
          %p195 = pneg %p102
        $region30: #{positional_encoding_forward.1} parent=27 // pred_check_branch
          %197 = sbr.rel (%p195) target = $region32
        $region31: #{positional_encoding_forward.1} parent=27 // pred_region
          %s199 = ssub.s32 128, 128
          %200 = vsyncadd %s191, %s199
          %s201 = sadd.s32 %s20, %s21
          %s202 = smul.addr %s201, 128
          %s203 = scalar_lea.hbm %s2, %s202
          %s205 = sshll.u32 %s194, 4
          %s206 = int_to_ptr.vmem [resolvable:$true] %s205
          %208 = dma.vmem_to_hbm [thread:$0]  %s206, 128, %s203, %s191
        $region32: #{positional_encoding_forward.1} parent=27 // pred_fallthru
          _
      $region28: #{positional_encoding_forward.1} parent=5 // pred_fallthru
        _
      %p209 = scmp.le.s32.totalorder 2, %s11
      // Predicated region
      $region33: #{positional_encoding_forward.1} parent=5 // pred_check
        %p210 = pneg %p209
      $region34: #{positional_encoding_forward.1} parent=5 // pred_check_branch
        %212 = sbr.rel (%p210) target = $region36
      $region35: #{positional_encoding_forward.1} parent=5 // pred_region
        %s213 = ssub.s32 %s11, 2
        // Predicated region
        $region37: #{positional_encoding_forward.1} parent=35 // pred_check
          %p214 = pneg %p108
        $region38: #{positional_encoding_forward.1} parent=35 // pred_check_branch
          %216 = sbr.rel (%p214) target = $region40
        $region39: #{positional_encoding_forward.1} parent=35 // pred_region
          %s217 = sand.u32 %s93, 1
          %s218 = scalar_lea.sflag [#allocation3], %s217
          %s219 = sand.u32 %s93, 1
          %s220 = smul.addr %s219, 8
          %s221 = scalar_lea.vmem [#allocation2], %s220
          %222 = dma.done %s218, 128
        $region40: #{positional_encoding_forward.1} parent=35 // pred_fallthru
          _
      $region36: #{positional_encoding_forward.1} parent=5 // pred_fallthru
        _
    $region6: #{positional_encoding_forward.1} parent=1 // loop_footer
      %s15 = sadd.s32 1, %s11
    $region7: #{positional_encoding_forward.1} parent=1 // loop_footer_branch
      %10 = sbr.rel target = $region3
    $region8: #{positional_encoding_forward.1} parent=1 // loop_exit
      _
    %223 = vsyncpa [#allocation3], 1
    %s224 = scalar_lea.sflag [#allocation3], 1
    %225 = vsyncpa %s224, 1

</llo_original>
